<compile_context>
chip_gen: v6e
topology: v6e:2x2x1
jax: 0.10.0
libtpu: 0.0.40
codegen_flags: <defaults>
</compile_context>

<pallas_src>
import jax
import jax.numpy as jnp
from jax.experimental import pallas as pl
from jax.experimental.pallas import tpu as pltpu


# ---------------------------------------------------------------------------
# Kernels
# ---------------------------------------------------------------------------

def _mlp_fused_kernel(x_ref, w1_ref, b1_ref, w2_ref, b2_ref, o_ref):
    """Fully weight-resident path: one grid axis over rows."""
    # fc1 on the MXU in the native input dtype, f32 accumulation.
    h = jnp.dot(x_ref[...], w1_ref[...], preferred_element_type=jnp.float32)
    h = jax.nn.gelu(h + b1_ref[...], approximate=True)       # bias + GELU in f32
    # Cast the hidden activation back to the weight dtype so the second matmul
    # also takes the fast (bf16) MXU path and the tm*H intermediate is narrow.
    h = h.astype(w2_ref.dtype)
    out = jnp.dot(h, w2_ref[...], preferred_element_type=jnp.float32)
    o_ref[...] = (out + b2_ref[...]).astype(o_ref.dtype)


def _mlp_fused_htiled_kernel(x_ref, w1_ref, b1_ref, w2_ref, b2_ref, o_ref,
                             acc_ref):
    """Hidden-dim-tiled path: grid = (rows, H/th), f32 accumulator over th."""
    k = pl.program_id(1)

    @pl.when(k == 0)
    def _():
        acc_ref[...] = jnp.zeros_like(acc_ref)

    h = jnp.dot(x_ref[...], w1_ref[...], preferred_element_type=jnp.float32)
    h = jax.nn.gelu(h + b1_ref[...], approximate=True)
    h = h.astype(w2_ref.dtype)
    acc_ref[...] += jnp.dot(h, w2_ref[...], preferred_element_type=jnp.float32)

    @pl.when(k == pl.num_programs(1) - 1)
    def _():
        o_ref[...] = (acc_ref[...] + b2_ref[...]).astype(o_ref.dtype)


# ---------------------------------------------------------------------------
# Tiling / budgeting helpers
# ---------------------------------------------------------------------------

def _vmem_capacity_bytes():
    try:
        info = pltpu.get_tpu_info()
        cap = getattr(info, "vmem_capacity_bytes", None)
        if cap:
            return int(cap)
    except Exception:
        pass
    return 64 * 1024 * 1024  # conservative: v7x per-TensorCore VMEM


def _is_multi_core_tc():
    """True on chips with >1 TensorCore (v7x) — keep >=2 grid steps there."""
    try:
        kind = jax.devices()[0].device_kind.lower()
        return ("v7" in kind) or ("7x" in kind)
    except Exception:
        return False


def _pick_row_tile(m, per_row_bytes, row_budget_bytes, *, max_tile=2048,
                   prefer_split=False):
    """Pick (tm, padded_m). tm is a multiple of 8 dividing padded_m, or the
    full extent when the whole row range fits in one step."""
    if m <= 8:
        return m, m
    cap = max(8, min(max_tile, row_budget_bytes // max(per_row_bytes, 1)))
    if prefer_split and m >= 16:
        cap = min(cap, m // 2)        # let v7x's two TensorCores share the grid
    cap = min(cap, m)
    if cap >= m:
        return m, m                   # single full-extent tile (always legal)
    cap8 = cap - (cap % 8)
    for cand in range(cap8, 7, -8):   # largest multiple-of-8 divisor <= cap
        if m % cand == 0:
            return cand, m
    # No clean divisor (e.g. prime row count): pad rows to a tile multiple
    # instead of making the entire array one block.
    tm = max(8, cap8)
    padded = ((m + tm - 1) // tm) * tm
    return tm, padded


def _pick_hidden_tile(h_dim, f_dim, wbytes, weight_slab_budget):
    """Largest divisor of H that is a multiple of 128 whose streamed weight
    slabs (w1[:, th] + w2[th, :], double-buffered) fit the budget."""
    best = None
    for th in range(128, h_dim, 128):
        if h_dim % th == 0:
            slab = 2 * (2 * f_dim * th) * wbytes
            if slab <= weight_slab_budget:
                best = th
    return best


def _const_spec(block_shape, single_buffer):
    index_map = lambda *_: (0,) * len(block_shape)
    if single_buffer:
        return pl.BlockSpec(block_shape, index_map,
                            pipeline_mode=pl.Buffered(1))
    return pl.BlockSpec(block_shape, index_map)


# ---------------------------------------------------------------------------
# pallas_call builders
# ---------------------------------------------------------------------------

def _call_resident(x2, w1, b1_2, w2, b2_2, tm, vmem_limit, cost,
                   single_buffer):
    m, f = x2.shape
    h = w1.shape[1]
    return pl.pallas_call(
        _mlp_fused_kernel,
        out_shape=jax.ShapeDtypeStruct((m, f), x2.dtype),
        grid_spec=pltpu.PrefetchScalarGridSpec(
            num_scalar_prefetch=0,
            grid=(m // tm,),
            in_specs=[
                pl.BlockSpec((tm, f), lambda i: (i, 0)),     # x rows (streamed)
                _const_spec((f, h), single_buffer),          # w1 (resident)
                _const_spec((1, h), single_buffer),          # b1 (f32)
                _const_spec((h, f), single_buffer),          # w2 (resident)
                _const_spec((1, f), single_buffer),          # b2 (f32)
            ],
            out_specs=pl.BlockSpec((tm, f), lambda i: (i, 0)),
        ),
        compiler_params=pltpu.CompilerParams(
            dimension_semantics=("parallel",),
            vmem_limit_bytes=vmem_limit),
        cost_estimate=cost,
    )(x2, w1, b1_2, w2, b2_2)


def _call_h_tiled(x2, w1, b1_2, w2, b2_2, tm, th, vmem_limit, cost,
                  single_buffer):
    m, f = x2.shape
    h = w1.shape[1]
    return pl.pallas_call(
        _mlp_fused_htiled_kernel,
        out_shape=jax.ShapeDtypeStruct((m, f), x2.dtype),
        grid_spec=pltpu.PrefetchScalarGridSpec(
            num_scalar_prefetch=0,
            grid=(m // tm, h // th),
            in_specs=[
                pl.BlockSpec((tm, f), lambda i, k: (i, 0)),  # x rows
                pl.BlockSpec((f, th), lambda i, k: (0, k)),  # w1 column slab
                pl.BlockSpec((1, th), lambda i, k: (0, k)),  # b1 slab (f32)
                pl.BlockSpec((th, f), lambda i, k: (k, 0)),  # w2 row slab
                _const_spec((1, f), single_buffer),          # b2 (f32, resident)
            ],
            out_specs=pl.BlockSpec((tm, f), lambda i, k: (i, 0)),
            scratch_shapes=[pltpu.VMEM((tm, f), jnp.float32)],
        ),
        compiler_params=pltpu.CompilerParams(
            dimension_semantics=("parallel", "arbitrary"),
            vmem_limit_bytes=vmem_limit),
        cost_estimate=cost,
    )(x2, w1, b1_2, w2, b2_2)


# ---------------------------------------------------------------------------
# Public wrapper
# ---------------------------------------------------------------------------

def mlp_mlpmix_forward(x, w1, b1, w2, b2, *, force_h_tiled=False):
    """Fused fc1 -> GELU -> fc2 forward (dropout = identity).

    x : (..., F)            w1: (F, H)  b1: (H,)   (w1 == PyTorch fc1.weight.T)
    w2: (H, F)  b2: (F,)    returns (..., F) in x.dtype.
    """
    orig_shape = x.shape
    f = orig_shape[-1]
    h = w1.shape[-1]
    assert w1.shape == (f, h) and w2.shape == (h, f)
    assert b1.shape == (h,) and b2.shape == (f,)

    x2 = x.reshape(-1, f)                         # merge leading dims (free)
    m = x2.shape[0]
    # Pre-cast biases to f32 once in the wrapper: they stay resident, so no
    # per-grid-step VPU cast inside the kernel.
    b1_2 = b1.reshape(1, h).astype(jnp.float32)
    b2_2 = b2.reshape(1, f).astype(jnp.float32)

    xbytes = jnp.dtype(x.dtype).itemsize
    wbytes = jnp.dtype(w1.dtype).itemsize

    vmem_cap = _vmem_capacity_bytes()
    budget = int(vmem_cap * 0.85)                 # leave headroom
    weight_resident = 2 * f * h * wbytes + (h + f) * 4
    prefer_split = _is_multi_core_tc()

    # Path selection: fully resident weights unless they crowd out streaming.
    use_h_tiled = force_h_tiled or (weight_resident > budget * 0.55)
    th = None
    if use_h_tiled:
        th = _pick_hidden_tile(h, f, wbytes, int(budget * 0.5))
        if th is None:
            use_h_tiled = False                   # no legal H tile -> resident

    cost = pl.CostEstimate(
        flops=4 * m * f * h,
        transcendentals=m * h,
        bytes_accessed=2 * m * f * xbytes + 2 * f * h * wbytes + (h + f) * 4)

    if use_h_tiled:
        per_row = 4 * f * xbytes + 4 * f + th * (4 + xbytes)
        slab = 2 * (2 * f * th) * wbytes
        row_budget = max(budget - slab, 8 * per_row)
        need = slab + 8 * per_row + (h + f) * 4 + (4 << 20)
    else:
        per_row = 4 * f * xbytes + h * (4 + xbytes)
        row_budget = max(budget - 2 * weight_resident, 8 * per_row)
        need = 2 * weight_resident + 8 * per_row + (4 << 20)

    tm, padded_m = _pick_row_tile(m, per_row, row_budget,
                                  prefer_split=prefer_split)
    need += tm * per_row
    vmem_limit = int(min(budget, max(need, 32 << 20)))

    if padded_m != m:                             # rare: awkward row count
        x2 = jnp.pad(x2, ((0, padded_m - m), (0, 0)))

    try:
        if use_h_tiled:
            out = _call_h_tiled(x2, w1, b1_2, w2, b2_2, tm, th, vmem_limit,
                                cost, True)
        else:
            out = _call_resident(x2, w1, b1_2, w2, b2_2, tm, vmem_limit,
                                 cost, True)
    except Exception:
        # pl.Buffered(1) single-buffering may be unsupported on some jax
        # versions; retry with default double-buffered constant specs.
        if use_h_tiled:
            out = _call_h_tiled(x2, w1, b1_2, w2, b2_2, tm, th, vmem_limit,
                                cost, False)
        else:
            out = _call_resident(x2, w1, b1_2, w2, b2_2, tm, vmem_limit,
                                 cost, False)

    if padded_m != m:
        out = out[:m]
    return out.reshape(orig_shape)


class MLP_MLPmix:
    """JAX/Pallas mirror of the PyTorch MLP_MLPmix forward pass (inference)."""

    def __init__(self, num_features, expansion_factor, dropout, params):
        self.num_features = num_features
        self.num_hidden = num_features * expansion_factor
        self.dropout = dropout          # identity in this forward (eval / p=0)
        self.w1, self.b1, self.w2, self.b2 = params

    def __call__(self, x):
        return mlp_mlpmix_forward(x, self.w1, self.b1, self.w2, self.b2)


# ---------------------------------------------------------------------------
# Demo / self-check
# ---------------------------------------------------------------------------

if __name__ == "__main__":
    key = jax.random.PRNGKey(0)
    kx, k1, k2, k3, k4 = jax.random.split(key, 5)

    B, S, F_, E = 2, 8, 32, 4                 # batch=2, seq=8, num_features=32
    H = F_ * E                                # num_hidden = 128

    x = jax.random.normal(kx, (B, S, F_), dtype=jnp.float32)
    # Weights in (in, out) layout == PyTorch nn.Linear weight.T
    w1 = jax.random.normal(k1, (F_, H), dtype=jnp.float32) / jnp.sqrt(F_)
    b1 = jax.random.normal(k2, (H,), dtype=jnp.float32) * 0.01
    w2 = jax.random.normal(k3, (H, F_), dtype=jnp.float32) / jnp.sqrt(H)
    b2 = jax.random.normal(k4, (F_,), dtype=jnp.float32) * 0.01

    mlp = MLP_MLPmix(num_features=F_, expansion_factor=E, dropout=0.0,
                     params=(w1, b1, w2, b2))
    y = jax.block_until_ready(mlp(x))

    ref = jax.nn.gelu(x @ w1 + b1, approximate=True) @ w2 + b2
    assert y.shape == x.shape, f"shape mismatch: {y.shape} vs {x.shape}"
    assert jnp.allclose(y, ref, atol=1e-5, rtol=1e-5), "resident-path mismatch"

    # Also exercise the hidden-dim-tiled accumulator path (the v7x fallback
    # for weights that do not fit VMEM) at a small shape.
    H2 = 256
    w1b = jax.random.normal(k1, (F_, H2), dtype=jnp.float32) / jnp.sqrt(F_)
    b1b = jax.random.normal(k2, (H2,), dtype=jnp.float32) * 0.01
    w2b = jax.random.normal(k3, (H2, F_), dtype=jnp.float32) / jnp.sqrt(H2)
    y2 = jax.block_until_ready(
        mlp_mlpmix_forward(x, w1b, b1b, w2b, b2, force_h_tiled=True))
    ref2 = jax.nn.gelu(x @ w1b + b1b, approximate=True) @ w2b + b2
    assert jnp.allclose(y2, ref2, atol=1e-4, rtol=1e-4), "H-tiled-path mismatch"

    print("KERNEL_OK")
</pallas_src>

<mosaic_0001>
module attributes {stable_mosaic.version = 11 : i64} {
  func.func @_mlp_fused_kernel(%arg0: i32, %arg1: memref<16x32xf32, #tpu.memory_space<vmem>>, %arg2: memref<32x128xf32, #tpu.memory_space<vmem>>, %arg3: memref<1x128xf32, #tpu.memory_space<vmem>>, %arg4: memref<128x32xf32, #tpu.memory_space<vmem>>, %arg5: memref<1x32xf32, #tpu.memory_space<vmem>>, %arg6: memref<16x32xf32, #tpu.memory_space<vmem>>) attributes {dimension_semantics = [#tpu.dimension_semantics<parallel>], iteration_bounds = array<i64: 1>, scalar_prefetch = 0 : i64, scratch_operands = 0 : i64, tpu.core_type = #tpu.core_type<tc>, window_params = [{transform_indices = @transform_0, window_bounds = array<i64: 16, 32>}, {pipeline_mode = #tpu.pipeline_mode<synchronous>, transform_indices = @transform_1, window_bounds = array<i64: 32, 128>}, {pipeline_mode = #tpu.pipeline_mode<synchronous>, transform_indices = @transform_2, window_bounds = array<i64: 1, 128>}, {pipeline_mode = #tpu.pipeline_mode<synchronous>, transform_indices = @transform_3, window_bounds = array<i64: 128, 32>}, {pipeline_mode = #tpu.pipeline_mode<synchronous>, transform_indices = @transform_4, window_bounds = array<i64: 1, 32>}, {transform_indices = @transform_5, window_bounds = array<i64: 16, 32>}]} {
    %c0 = arith.constant 0 : index
    %c0_0 = arith.constant 0 : index
    %0 = vector.load %arg1[%c0, %c0_0] : memref<16x32xf32, #tpu.memory_space<vmem>>, vector<16x32xf32>
    %c0_1 = arith.constant 0 : index
    %c0_2 = arith.constant 0 : index
    %1 = vector.load %arg2[%c0_1, %c0_2] : memref<32x128xf32, #tpu.memory_space<vmem>>, vector<32x128xf32>
    %cst = arith.constant dense<0.000000e+00> : vector<16x128xf32>
    %2 = tpu.matmul %0, %1, %cst {dimension_numbers = #tpu.dot_dimension_numbers<[1], [0], [0], [1], [0, 0, 1, 1], [], []>} : vector<16x32xf32>, vector<32x128xf32>, vector<16x128xf32> -> vector<16x128xf32>
    %c0_3 = arith.constant 0 : index
    %c0_4 = arith.constant 0 : index
    %3 = vector.load %arg3[%c0_3, %c0_4] : memref<1x128xf32, #tpu.memory_space<vmem>>, vector<1x128xf32>
    %4 = vector.broadcast %3 : vector<1x128xf32> to vector<16x128xf32>
    %5 = arith.addf %2, %4 : vector<16x128xf32>
    %6 = arith.mulf %5, %5 : vector<16x128xf32>
    %7 = arith.mulf %5, %6 : vector<16x128xf32>
    %cst_5 = arith.constant 4.471500e-02 : f32
    %8 = vector.broadcast %cst_5 : f32 to vector<16x128xf32>
    %9 = arith.mulf %8, %7 : vector<16x128xf32>
    %10 = arith.addf %5, %9 : vector<16x128xf32>
    %cst_6 = arith.constant 0.797884583 : f32
    %11 = vector.broadcast %cst_6 : f32 to vector<16x128xf32>
    %12 = arith.mulf %11, %10 : vector<16x128xf32>
    %13 = math.tanh %12 : vector<16x128xf32>
    %cst_7 = arith.constant 1.000000e+00 : f32
    %14 = vector.broadcast %cst_7 : f32 to vector<16x128xf32>
    %15 = arith.addf %14, %13 : vector<16x128xf32>
    %cst_8 = arith.constant 5.000000e-01 : f32
    %16 = vector.broadcast %cst_8 : f32 to vector<16x128xf32>
    %17 = arith.mulf %16, %15 : vector<16x128xf32>
    %18 = arith.mulf %5, %17 : vector<16x128xf32>
    %c0_9 = arith.constant 0 : index
    %c0_10 = arith.constant 0 : index
    %19 = vector.load %arg4[%c0_9, %c0_10] : memref<128x32xf32, #tpu.memory_space<vmem>>, vector<128x32xf32>
    %cst_11 = arith.constant dense<0.000000e+00> : vector<16x32xf32>
    %20 = tpu.matmul %18, %19, %cst_11 {dimension_numbers = #tpu.dot_dimension_numbers<[1], [0], [0], [1], [0, 0, 1, 1], [], []>} : vector<16x128xf32>, vector<128x32xf32>, vector<16x32xf32> -> vector<16x32xf32>
    %c0_12 = arith.constant 0 : index
    %c0_13 = arith.constant 0 : index
    %21 = vector.load %arg5[%c0_12, %c0_13] : memref<1x32xf32, #tpu.memory_space<vmem>>, vector<1x32xf32>
    %22 = vector.broadcast %21 : vector<1x32xf32> to vector<16x32xf32>
    %23 = arith.addf %20, %22 : vector<16x32xf32>
    %c0_14 = arith.constant 0 : index
    %c0_15 = arith.constant 0 : index
    %24 = vector.load %arg6[%c0_14, %c0_15] : memref<16x32xf32, #tpu.memory_space<vmem>>, vector<16x32xf32>
    tpu.vector_store %arg6[%c0_14, %c0_15], %23 {strides = array<i32>} : memref<16x32xf32, #tpu.memory_space<vmem>>, vector<16x32xf32>,
    return
  }
  func.func @transform_0(%arg0: i32) -> (i32, i32) {
    %c0_i32 = arith.constant 0 : i32
    %c0_i32_0 = arith.constant 0 : i32
    return %arg0, %c0_i32 : i32, i32
  }
  func.func @transform_1(%arg0: i32) -> (i32, i32) {
    %c0_i32 = arith.constant 0 : i32
    %c0_i32_0 = arith.constant 0 : i32
    %c0_i32_1 = arith.constant 0 : i32
    return %c0_i32, %c0_i32_0 : i32, i32
  }
  func.func @transform_2(%arg0: i32) -> (i32, i32) {
    %c0_i32 = arith.constant 0 : i32
    %c0_i32_0 = arith.constant 0 : i32
    %c0_i32_1 = arith.constant 0 : i32
    return %c0_i32, %c0_i32_0 : i32, i32
  }
  func.func @transform_3(%arg0: i32) -> (i32, i32) {
    %c0_i32 = arith.constant 0 : i32
    %c0_i32_0 = arith.constant 0 : i32
    %c0_i32_1 = arith.constant 0 : i32
    return %c0_i32, %c0_i32_0 : i32, i32
  }
  func.func @transform_4(%arg0: i32) -> (i32, i32) {
    %c0_i32 = arith.constant 0 : i32
    %c0_i32_0 = arith.constant 0 : i32
    %c0_i32_1 = arith.constant 0 : i32
    return %c0_i32, %c0_i32_0 : i32, i32
  }
  func.func @transform_5(%arg0: i32) -> (i32, i32) {
    %c0_i32 = arith.constant 0 : i32
    %c0_i32_0 = arith.constant 0 : i32
    return %arg0, %c0_i32 : i32, i32
  }
}

module attributes {stable_mosaic.version = 11 : i64} {
  func.func @_mlp_fused_kernel(%arg0: i32, %arg1: memref<16x32xf32, #tpu.memory_space<vmem>>, %arg2: memref<32x128xf32, #tpu.memory_space<vmem>>, %arg3: memref<1x128xf32, #tpu.memory_space<vmem>>, %arg4: memref<128x32xf32, #tpu.memory_space<vmem>>, %arg5: memref<1x32xf32, #tpu.memory_space<vmem>>, %arg6: memref<16x32xf32, #tpu.memory_space<vmem>>) attributes {dimension_semantics = [#tpu.dimension_semantics<parallel>], iteration_bounds = array<i64: 1>, scalar_prefetch = 0 : i64, scratch_operands = 0 : i64, tpu.core_type = #tpu.core_type<tc>, window_params = [{transform_indices = @transform_0, window_bounds = array<i64: 16, 32>}, {pipeline_mode = #tpu.pipeline_mode<synchronous>, transform_indices = @transform_1, window_bounds = array<i64: 32, 128>}, {pipeline_mode = #tpu.pipeline_mode<synchronous>, transform_indices = @transform_2, window_bounds = array<i64: 1, 128>}, {pipeline_mode = #tpu.pipeline_mode<synchronous>, transform_indices = @transform_3, window_bounds = array<i64: 128, 32>}, {pipeline_mode = #tpu.pipeline_mode<synchronous>, transform_indices = @transform_4, window_bounds = array<i64: 1, 32>}, {transform_indices = @transform_5, window_bounds = array<i64: 16, 32>}]} {
    %c0 = arith.constant 0 : index
    %c0_0 = arith.constant 0 : index
    %0 = vector.load %arg1[%c0, %c0_0] : memref<16x32xf32, #tpu.memory_space<vmem>>, vector<16x32xf32>
    %c0_1 = arith.constant 0 : index
    %c0_2 = arith.constant 0 : index
    %1 = vector.load %arg2[%c0_1, %c0_2] : memref<32x128xf32, #tpu.memory_space<vmem>>, vector<32x128xf32>
    %cst = arith.constant dense<0.000000e+00> : vector<16x128xf32>
    %2 = tpu.matmul %0, %1, %cst {dimension_numbers = #tpu.dot_dimension_numbers<[1], [0], [0], [1], [0, 0, 1, 1], [], []>} : vector<16x32xf32>, vector<32x128xf32>, vector<16x128xf32> -> vector<16x128xf32>
    %c0_3 = arith.constant 0 : index
    %c0_4 = arith.constant 0 : index
    %3 = vector.load %arg3[%c0_3, %c0_4] : memref<1x128xf32, #tpu.memory_space<vmem>>, vector<1x128xf32>
    %4 = vector.broadcast %3 : vector<1x128xf32> to vector<16x128xf32>
    %5 = arith.addf %2, %4 : vector<16x128xf32>
    %6 = arith.mulf %5, %5 : vector<16x128xf32>
    %7 = arith.mulf %5, %6 : vector<16x128xf32>
    %cst_5 = arith.constant 4.471500e-02 : f32
    %8 = vector.broadcast %cst_5 : f32 to vector<16x128xf32>
    %9 = arith.mulf %8, %7 : vector<16x128xf32>
    %10 = arith.addf %5, %9 : vector<16x128xf32>
    %cst_6 = arith.constant 0.797884583 : f32
    %11 = vector.broadcast %cst_6 : f32 to vector<16x128xf32>
    %12 = arith.mulf %11, %10 : vector<16x128xf32>
    %13 = math.tanh %12 : vector<16x128xf32>
    %cst_7 = arith.constant 1.000000e+00 : f32
    %14 = vector.broadcast %cst_7 : f32 to vector<16x128xf32>
    %15 = arith.addf %14, %13 : vector<16x128xf32>
    %cst_8 = arith.constant 5.000000e-01 : f32
    %16 = vector.broadcast %cst_8 : f32 to vector<16x128xf32>
    %17 = arith.mulf %16, %15 : vector<16x128xf32>
    %18 = arith.mulf %5, %17 : vector<16x128xf32>
    %c0_9 = arith.constant 0 : index
    %c0_10 = arith.constant 0 : index
    %19 = vector.load %arg4[%c0_9, %c0_10] : memref<128x32xf32, #tpu.memory_space<vmem>>, vector<128x32xf32>
    %cst_11 = arith.constant dense<0.000000e+00> : vector<16x32xf32>
    %20 = tpu.matmul %18, %19, %cst_11 {dimension_numbers = #tpu.dot_dimension_numbers<[1], [0], [0], [1], [0, 0, 1, 1], [], []>} : vector<16x128xf32>, vector<128x32xf32>, vector<16x32xf32> -> vector<16x32xf32>
    %c0_12 = arith.constant 0 : index
    %c0_13 = arith.constant 0 : index
    %21 = vector.load %arg5[%c0_12, %c0_13] : memref<1x32xf32, #tpu.memory_space<vmem>>, vector<1x32xf32>
    %22 = vector.broadcast %21 : vector<1x32xf32> to vector<16x32xf32>
    %23 = arith.addf %20, %22 : vector<16x32xf32>
    %c0_14 = arith.constant 0 : index
    %c0_15 = arith.constant 0 : index
    %24 = vector.load %arg6[%c0_14, %c0_15] : memref<16x32xf32, #tpu.memory_space<vmem>>, vector<16x32xf32>
    tpu.vector_store %arg6[%c0_14, %c0_15], %23 {strides = array<i32>} : memref<16x32xf32, #tpu.memory_space<vmem>>, vector<16x32xf32>,
    return
  }
  func.func @transform_0(%arg0: i32) -> (i32, i32) {
    %c0_i32 = arith.constant 0 : i32
    %c0_i32_0 = arith.constant 0 : i32
    return %arg0, %c0_i32 : i32, i32
  }
  func.func @transform_1(%arg0: i32) -> (i32, i32) {
    %c0_i32 = arith.constant 0 : i32
    %c0_i32_0 = arith.constant 0 : i32
    %c0_i32_1 = arith.constant 0 : i32
    return %c0_i32, %c0_i32_0 : i32, i32
  }
  func.func @transform_2(%arg0: i32) -> (i32, i32) {
    %c0_i32 = arith.constant 0 : i32
    %c0_i32_0 = arith.constant 0 : i32
    %c0_i32_1 = arith.constant 0 : i32
    return %c0_i32, %c0_i32_0 : i32, i32
  }
  func.func @transform_3(%arg0: i32) -> (i32, i32) {
    %c0_i32 = arith.constant 0 : i32
    %c0_i32_0 = arith.constant 0 : i32
    %c0_i32_1 = arith.constant 0 : i32
    return %c0_i32, %c0_i32_0 : i32, i32
  }
  func.func @transform_4(%arg0: i32) -> (i32, i32) {
    %c0_i32 = arith.constant 0 : i32
    %c0_i32_0 = arith.constant 0 : i32
    %c0_i32_1 = arith.constant 0 : i32
    return %c0_i32, %c0_i32_0 : i32, i32
  }
  func.func @transform_5(%arg0: i32) -> (i32, i32) {
    %c0_i32 = arith.constant 0 : i32
    %c0_i32_0 = arith.constant 0 : i32
    return %arg0, %c0_i32 : i32, i32
  }
}

</mosaic_0001>

<llo_original>
// kernel: tpu_custom_call.1
$region0: #{tpu_custom_call.1}
  #allocation0 [shape = 'u32[]', space=smem, size = 0x4, offset = 0x4, fixed_abs, tag = 'smem constant byte address 0x4 - core index']
  #allocation1 [shape = 'u32[144,128]{1,0:T(1,128)}', space=vmem, size = 0x12000, scoped, tag = 'internal scratch']
  %s0 = inlined_call_operand.vmem [shape: f32[16,32], index: 0, kind: input, shape index: {}]
  %s1 = inlined_call_operand.vmem [shape: f32[32,128], index: 1, kind: input, shape index: {}]
  %s2 = inlined_call_operand.vmem [shape: f32[1,128], index: 2, kind: input, shape index: {}]
  %s3 = inlined_call_operand.vmem [shape: f32[128,32], index: 3, kind: input, shape index: {}]
  %s4 = inlined_call_operand.vmem [shape: f32[1,32], index: 4, kind: input, shape index: {}]
  %s5 = inlined_call_operand.hbm [shape: f32[16,32], index: 5, kind: output, shape index: {}]
  %s6 = sld [smem:[#allocation0]]
  $region30: #{tpu_custom_call.1} parent=0
    _
  %s8 = ssub.s32 1, %s6
  %s9 = scalar_select 0, %s8, %s6
  $region1: #{tpu_custom_call.1} parent=0
    #allocation2 [shape = 'u8[8192]{0}', space=vmem, size = 0x2000, scoped, tag = 'output window, operand 0, single buffered']
    #allocation3 [shape = 's32[1]{0}', space=sflag, size = 0x4, scoped, tag = 'scoped memory for tpu_custom_call.1']
    %10 = vsyncpa [#allocation3], 0
    // Predicated region
    $region2: #{tpu_custom_call.1} parent=1 // pred_check
      _
    $region3: #{tpu_custom_call.1} parent=1 // pred_check_branch
      %12 = sbr.rel (0) target = $region5
    $region4: #{tpu_custom_call.1} parent=1 // pred_region
      _
    $region5: #{tpu_custom_call.1} parent=1 // pred_fallthru
      _
    // Predicated region
    $region6: #{tpu_custom_call.1} parent=1 // pred_check
      _
    $region7: #{tpu_custom_call.1} parent=1 // pred_check_branch
      %14 = sbr.rel (0) target = $region9
    $region8: #{tpu_custom_call.1} parent=1 // pred_region
      _
    $region9: #{tpu_custom_call.1} parent=1 // pred_fallthru
      _
    // Predicated region
    $region10: #{tpu_custom_call.1} parent=1 // pred_check
      _
    $region11: #{tpu_custom_call.1} parent=1 // pred_check_branch
      %16 = sbr.rel (0) target = $region13
    $region12: #{tpu_custom_call.1} parent=1 // pred_region
      _
    $region13: #{tpu_custom_call.1} parent=1 // pred_fallthru
      _
    // Predicated region
    $region14: #{tpu_custom_call.1} parent=1 // pred_check
      _
    $region15: #{tpu_custom_call.1} parent=1 // pred_check_branch
      %18 = sbr.rel (0) target = $region17
    $region16: #{tpu_custom_call.1} parent=1 // pred_region
      _
    $region17: #{tpu_custom_call.1} parent=1 // pred_fallthru
      _
    // Predicated region
    $region18: #{tpu_custom_call.1} parent=1 // pred_check
      _
    $region19: #{tpu_custom_call.1} parent=1 // pred_check_branch
      %20 = sbr.rel (0) target = $region21
    $region20: #{tpu_custom_call.1} parent=1 // pred_region
      _
    $region21: #{tpu_custom_call.1} parent=1 // pred_fallthru
      _
    %v21 = vld [vmem:[%s0] sm:$0xff]
    %v22 = vld [vmem:[%s0 + $0x8] sm:$0xff]
    %v23 = vld [vmem:[%s1] sm:$0xff]
    %v24 = vld [vmem:[%s1 + $0x8] sm:$0xff]
    %v25 = vld [vmem:[%s1 + $0x10] sm:$0xff]
    %v26 = vld [vmem:[%s1 + $0x18] sm:$0xff]
    %v27 = vld [vmem:[%s2] sm:$0x1]
    %v29 = vlaneseq
    %v30 = vshrl.u32 %v29, 7
    %v31 = vsub.s32 0, %v30
    %v32 = vrot.slane %v27, %v31
    %vm34 = vcmask 261120
    %v36 = vsel %vm34, %v21, 0
    %v39 = vsel %vm34, %v22, 0
    %41 = vmatprep.subr.mxu0 0.0
    %42 = vmatpush1.msra.mxu0 0.0
    %43 = vmatprep.subr.mxu0 0.0
    %44 = vmatpush1.msra.mxu0 0.0
    %45 = vmatprep.subr.mxu0 0.0
    %46 = vmatpush1.msra.mxu0 0.0
    %47 = vmatprep.subr.mxu0 0.0
    %48 = vmatpush1.msra.mxu0 0.0
    %49 = vmatprep.subr.mxu0 0.0
    %50 = vmatpush1.msra.mxu0 0.0
    %51 = vmatprep.subr.mxu0 0.0
    %52 = vmatpush1.msra.mxu0 0.0
    %53 = vmatprep.subr.mxu0 0.0
    %54 = vmatpush1.msra.mxu0 0.0
    %55 = vmatprep.subr.mxu0 0.0
    %56 = vmatpush1.msra.mxu0 0.0
    %57 = vmatprep.subr.mxu0 0.0
    %58 = vmatpush1.msra.mxu0 0.0
    %59 = vmatprep.subr.mxu0 0.0
    %60 = vmatpush1.msra.mxu0 0.0
    %61 = vmatprep.subr.mxu0 0.0
    %62 = vmatpush1.msra.mxu0 0.0
    %63 = vmatprep.subr.mxu0 0.0
    %64 = vmatpush1.msra.mxu0 0.0
    %65 = vmatprep.subr.mxu0 0.0
    %66 = vmatpush1.msra.mxu0 %v26
    %67 = vmatprep.subr.mxu0 0.0
    %68 = vmatpush1.msra.mxu0 %v25
    %69 = vmatprep.subr.mxu0 0.0
    %70 = vmatpush1.msra.mxu0 %v24
    %71 = vmatprep.subr.mxu0 0.0
    %72 = vmatpush1.msra.mxu0 %v23
    %73 = vmatprep.subr.mxu0 0.0
    %74 = vmatpush2.msra.mxu0 0.0
    %75 = vmatprep.subr.mxu0 0.0
    %76 = vmatpush2.msra.mxu0 0.0
    %77 = vmatprep.subr.mxu0 0.0
    %78 = vmatpush2.msra.mxu0 0.0
    %79 = vmatprep.subr.mxu0 0.0
    %80 = vmatpush2.msra.mxu0 0.0
    %81 = vmatprep.subr.mxu0 0.0
    %82 = vmatpush2.msra.mxu0 0.0
    %83 = vmatprep.subr.mxu0 0.0
    %84 = vmatpush2.msra.mxu0 0.0
    %85 = vmatprep.subr.mxu0 0.0
    %86 = vmatpush2.msra.mxu0 0.0
    %87 = vmatprep.subr.mxu0 0.0
    %88 = vmatpush2.msra.mxu0 0.0
    %89 = vmatprep.subr.mxu0 0.0
    %90 = vmatpush2.msra.mxu0 0.0
    %91 = vmatprep.subr.mxu0 0.0
    %92 = vmatpush2.msra.mxu0 0.0
    %93 = vmatprep.subr.mxu0 0.0
    %94 = vmatpush2.msra.mxu0 0.0
    %95 = vmatprep.subr.mxu0 0.0
    %96 = vmatpush2.msra.mxu0 0.0
    %97 = vmatprep.subr.mxu0 0.0
    %98 = vmatpush2.msra.mxu0 0.0
    %99 = vmatprep.subr.mxu0 0.0
    %100 = vmatpush2.msra.mxu0 0.0
    %101 = vmatprep.subr.mxu0 0.0
    %102 = vmatpush2.msra.mxu0 0.0
    %103 = vmatprep.subr.mxu0 0.0
    %104 = vmatpush2.msra.mxu0 0.0
    %105 = vmatprep.mubr.f32.mxu0 0.0
    %106 = vmatmul.mubr.f32.gmra.mxu0 %v36
    %v107 = vpop.f32.mrf.mxu0
    %v108 = vadd.f32 %v32, %v107
    %v109 = vpop.f32.mrf.mxu0
    %110 = vmatprep.mubr.f32.mxu0 0.0
    %111 = vmatmul.mubr.f32.gmra.mxu0 %v39
    %v112 = vpop.f32.mrf.mxu0
    %v113 = vadd.f32 %v32, %v112
    %v114 = vpop.f32.mrf.mxu0
    %115 = vdwg.mxu0
    %v116 = vmul.f32 %v108, %v108
    %v117 = vmul.f32 %v113, %v113
    %v118 = vmul.f32 %v108, %v116
    %v119 = vmul.f32 %v113, %v117
    %v120 = vmul.f32 %v118, 0.044715
    %v121 = vmul.f32 %v119, 0.044715
    %v122 = vadd.f32 %v108, %v120
    %v123 = vadd.f32 %v113, %v121
    %v124 = vmul.f32 %v122, 0.7978846
    %v125 = vmul.f32 %v123, 0.7978846
    %v126 = vtanh.pop %v124
    %v127 = vtanh.pop %v125
    %v128 = vadd.f32 %v126, 1.0
    %v129 = vadd.f32 %v127, 1.0
    %v130 = vmul.f32 %v128, 0.5
    %v131 = vmul.f32 %v129, 0.5
    %v132 = vmul.f32 %v108, %v130
    %v133 = vmul.f32 %v113, %v131
    %v134 = vld [vmem:[%s3] sm:$0xff]
    %v135 = vld [vmem:[%s3 + $0x8] sm:$0xff]
    %v136 = vld [vmem:[%s3 + $0x10] sm:$0xff]
    %v137 = vld [vmem:[%s3 + $0x18] sm:$0xff]
    %v138 = vld [vmem:[%s3 + $0x20] sm:$0xff]
    %v139 = vld [vmem:[%s3 + $0x28] sm:$0xff]
    %v140 = vld [vmem:[%s3 + $0x30] sm:$0xff]
    %v141 = vld [vmem:[%s3 + $0x38] sm:$0xff]
    %v142 = vld [vmem:[%s3 + $0x40] sm:$0xff]
    %v143 = vld [vmem:[%s3 + $0x48] sm:$0xff]
    %v144 = vld [vmem:[%s3 + $0x50] sm:$0xff]
    %v145 = vld [vmem:[%s3 + $0x58] sm:$0xff]
    %v146 = vld [vmem:[%s3 + $0x60] sm:$0xff]
    %v147 = vld [vmem:[%s3 + $0x68] sm:$0xff]
    %v148 = vld [vmem:[%s3 + $0x70] sm:$0xff]
    %v149 = vld [vmem:[%s3 + $0x78] sm:$0xff]
    %v150 = vld [vmem:[%s4] sm:$0x1]
    %v152 = vlaneseq
    %v153 = vshrl.u32 %v152, 7
    %v154 = vsub.s32 0, %v153
    %v155 = vrot.slane %v150, %v154
    %157 = vmatprep.subr.mxu0 0.0
    %158 = vmatpush1.msra.mxu0 %v149
    %159 = vmatprep.subr.mxu0 0.0
    %160 = vmatpush1.msra.mxu0 %v148
    %161 = vmatprep.subr.mxu0 0.0
    %162 = vmatpush1.msra.mxu0 %v147
    %163 = vmatprep.subr.mxu0 0.0
    %164 = vmatpush1.msra.mxu0 %v146
    %165 = vmatprep.subr.mxu0 0.0
    %166 = vmatpush1.msra.mxu0 %v145
    %167 = vmatprep.subr.mxu0 0.0
    %168 = vmatpush1.msra.mxu0 %v144
    %169 = vmatprep.subr.mxu0 0.0
    %170 = vmatpush1.msra.mxu0 %v143
    %171 = vmatprep.subr.mxu0 0.0
    %172 = vmatpush1.msra.mxu0 %v142
    %173 = vmatprep.subr.mxu0 0.0
    %174 = vmatpush1.msra.mxu0 %v141
    %175 = vmatprep.subr.mxu0 0.0
    %176 = vmatpush1.msra.mxu0 %v140
    %177 = vmatprep.subr.mxu0 0.0
    %178 = vmatpush1.msra.mxu0 %v139
    %179 = vmatprep.subr.mxu0 0.0
    %180 = vmatpush1.msra.mxu0 %v138
    %181 = vmatprep.subr.mxu0 0.0
    %182 = vmatpush1.msra.mxu0 %v137
    %183 = vmatprep.subr.mxu0 0.0
    %184 = vmatpush1.msra.mxu0 %v136
    %185 = vmatprep.subr.mxu0 0.0
    %186 = vmatpush1.msra.mxu0 %v135
    %187 = vmatprep.subr.mxu0 0.0
    %188 = vmatpush1.msra.mxu0 %v134
    %189 = vmatprep.subr.mxu0 0.0
    %190 = vmatpush2.msra.mxu0 0.0
    %191 = vmatprep.subr.mxu0 0.0
    %192 = vmatpush2.msra.mxu0 0.0
    %193 = vmatprep.subr.mxu0 0.0
    %194 = vmatpush2.msra.mxu0 0.0
    %195 = vmatprep.subr.mxu0 0.0
    %196 = vmatpush2.msra.mxu0 0.0
    %197 = vmatprep.subr.mxu0 0.0
    %198 = vmatpush2.msra.mxu0 0.0
    %199 = vmatprep.subr.mxu0 0.0
    %200 = vmatpush2.msra.mxu0 0.0
    %201 = vmatprep.subr.mxu0 0.0
    %202 = vmatpush2.msra.mxu0 0.0
    %203 = vmatprep.subr.mxu0 0.0
    %204 = vmatpush2.msra.mxu0 0.0
    %205 = vmatprep.subr.mxu0 0.0
    %206 = vmatpush2.msra.mxu0 0.0
    %207 = vmatprep.subr.mxu0 0.0
    %208 = vmatpush2.msra.mxu0 0.0
    %209 = vmatprep.subr.mxu0 0.0
    %210 = vmatpush2.msra.mxu0 0.0
    %211 = vmatprep.subr.mxu0 0.0
    %212 = vmatpush2.msra.mxu0 0.0
    %213 = vmatprep.subr.mxu0 0.0
    %214 = vmatpush2.msra.mxu0 0.0
    %215 = vmatprep.subr.mxu0 0.0
    %216 = vmatpush2.msra.mxu0 0.0
    %217 = vmatprep.subr.mxu0 0.0
    %218 = vmatpush2.msra.mxu0 0.0
    %219 = vmatprep.subr.mxu0 0.0
    %220 = vmatpush2.msra.mxu0 0.0
    %221 = vmatprep.mubr.f32.mxu0 0.0
    %222 = vmatmul.mubr.f32.gmra.mxu0 %v132
    %v223 = vpop.f32.mrf.mxu0
    %v224 = vadd.f32 %v155, %v223
    %v225 = vpop.f32.mrf.mxu0
    %226 = vmatprep.mubr.f32.mxu0 0.0
    %227 = vmatmul.mubr.f32.gmra.mxu0 %v133
    %v228 = vpop.f32.mrf.mxu0
    %v229 = vadd.f32 %v155, %v228
    %v230 = vpop.f32.mrf.mxu0
    %231 = vdwg.mxu0
    %232 = vst.msk [vmem:[#allocation2] sm:$0xff] %vm34, %v224
    %233 = vst.msk [vmem:[#allocation2 + $0x8] sm:$0xff] %vm34, %v229
    // Predicated region
    $region22: #{tpu_custom_call.1} parent=1 // pred_check
      _
    $region23: #{tpu_custom_call.1} parent=1 // pred_check_branch
      %235 = sbr.rel (0) target = $region25
    $region24: #{tpu_custom_call.1} parent=1 // pred_region
      %s237 = ssub.s32 256, 256
      %238 = vsyncadd [#allocation3], %s237
      %s239 = sshll.u32 [#allocation2], 4
      %s240 = int_to_ptr.vmem [resolvable:$true] %s239
      %245 = dma.vmem_to_hbm [thread:$0]  %s240, 256, %s5, [#allocation3], 128, 128, 8
    $region25: #{tpu_custom_call.1} parent=1 // pred_fallthru
      _
    // Predicated region
    $region26: #{tpu_custom_call.1} parent=1 // pred_check
      _
    $region27: #{tpu_custom_call.1} parent=1 // pred_check_branch
      %247 = sbr.rel (0) target = $region29
    $region28: #{tpu_custom_call.1} parent=1 // pred_region
      %248 = dma.done [#allocation3], 256
    $region29: #{tpu_custom_call.1} parent=1 // pred_fallthru
      _
    %249 = vsyncpa [#allocation3], 1

// kernel: tpu_custom_call.1
$region0: #{tpu_custom_call.1}
  #allocation0 [shape = 'u32[]', space=smem, size = 0x4, offset = 0x4, fixed_abs, tag = 'smem constant byte address 0x4 - core index']
  #allocation1 [shape = 'u32[144,128]{1,0:T(1,128)}', space=vmem, size = 0x12000, scoped, tag = 'internal scratch']
  %s0 = inlined_call_operand.vmem [shape: f32[16,32], index: 0, kind: input, shape index: {}]
  %s1 = inlined_call_operand.vmem [shape: f32[32,128], index: 1, kind: input, shape index: {}]
  %s2 = inlined_call_operand.vmem [shape: f32[1,128], index: 2, kind: input, shape index: {}]
  %s3 = inlined_call_operand.vmem [shape: f32[128,32], index: 3, kind: input, shape index: {}]
  %s4 = inlined_call_operand.vmem [shape: f32[1,32], index: 4, kind: input, shape index: {}]
  %s5 = inlined_call_operand.hbm [shape: f32[16,32], index: 5, kind: output, shape index: {}]
  %s6 = sld [smem:[#allocation0]]
  $region30: #{tpu_custom_call.1} parent=0
    _
  %s8 = ssub.s32 1, %s6
  %s9 = scalar_select 0, %s8, %s6
  $region1: #{tpu_custom_call.1} parent=0
    #allocation2 [shape = 'u8[8192]{0}', space=vmem, size = 0x2000, scoped, tag = 'output window, operand 0, single buffered']
    #allocation3 [shape = 's32[1]{0}', space=sflag, size = 0x4, scoped, tag = 'scoped memory for tpu_custom_call.1']
    %10 = vsyncpa [#allocation3], 0
    // Predicated region
    $region2: #{tpu_custom_call.1} parent=1 // pred_check
      _
    $region3: #{tpu_custom_call.1} parent=1 // pred_check_branch
      %12 = sbr.rel (0) target = $region5
    $region4: #{tpu_custom_call.1} parent=1 // pred_region
      _
    $region5: #{tpu_custom_call.1} parent=1 // pred_fallthru
      _
    // Predicated region
    $region6: #{tpu_custom_call.1} parent=1 // pred_check
      _
    $region7: #{tpu_custom_call.1} parent=1 // pred_check_branch
      %14 = sbr.rel (0) target = $region9
    $region8: #{tpu_custom_call.1} parent=1 // pred_region
      _
    $region9: #{tpu_custom_call.1} parent=1 // pred_fallthru
      _
    // Predicated region
    $region10: #{tpu_custom_call.1} parent=1 // pred_check
      _
    $region11: #{tpu_custom_call.1} parent=1 // pred_check_branch
      %16 = sbr.rel (0) target = $region13
    $region12: #{tpu_custom_call.1} parent=1 // pred_region
      _
    $region13: #{tpu_custom_call.1} parent=1 // pred_fallthru
      _
    // Predicated region
    $region14: #{tpu_custom_call.1} parent=1 // pred_check
      _
    $region15: #{tpu_custom_call.1} parent=1 // pred_check_branch
      %18 = sbr.rel (0) target = $region17
    $region16: #{tpu_custom_call.1} parent=1 // pred_region
      _
    $region17: #{tpu_custom_call.1} parent=1 // pred_fallthru
      _
    // Predicated region
    $region18: #{tpu_custom_call.1} parent=1 // pred_check
      _
    $region19: #{tpu_custom_call.1} parent=1 // pred_check_branch
      %20 = sbr.rel (0) target = $region21
    $region20: #{tpu_custom_call.1} parent=1 // pred_region
      _
    $region21: #{tpu_custom_call.1} parent=1 // pred_fallthru
      _
    %v21 = vld [vmem:[%s0] sm:$0xff]
    %v22 = vld [vmem:[%s0 + $0x8] sm:$0xff]
    %v23 = vld [vmem:[%s1] sm:$0xff]
    %v24 = vld [vmem:[%s1 + $0x8] sm:$0xff]
    %v25 = vld [vmem:[%s1 + $0x10] sm:$0xff]
    %v26 = vld [vmem:[%s1 + $0x18] sm:$0xff]
    %v27 = vld [vmem:[%s2] sm:$0x1]
    %v29 = vlaneseq
    %v30 = vshrl.u32 %v29, 7
    %v31 = vsub.s32 0, %v30
    %v32 = vrot.slane %v27, %v31
    %vm34 = vcmask 261120
    %v36 = vsel %vm34, %v21, 0
    %v39 = vsel %vm34, %v22, 0
    %41 = vmatprep.subr.mxu0 0.0
    %42 = vmatpush1.msra.mxu0 0.0
    %43 = vmatprep.subr.mxu0 0.0
    %44 = vmatpush1.msra.mxu0 0.0
    %45 = vmatprep.subr.mxu0 0.0
    %46 = vmatpush1.msra.mxu0 0.0
    %47 = vmatprep.subr.mxu0 0.0
    %48 = vmatpush1.msra.mxu0 0.0
    %49 = vmatprep.subr.mxu0 0.0
    %50 = vmatpush1.msra.mxu0 0.0
    %51 = vmatprep.subr.mxu0 0.0
    %52 = vmatpush1.msra.mxu0 0.0
    %53 = vmatprep.subr.mxu0 0.0
    %54 = vmatpush1.msra.mxu0 0.0
    %55 = vmatprep.subr.mxu0 0.0
    %56 = vmatpush1.msra.mxu0 0.0
    %57 = vmatprep.subr.mxu0 0.0
    %58 = vmatpush1.msra.mxu0 0.0
    %59 = vmatprep.subr.mxu0 0.0
    %60 = vmatpush1.msra.mxu0 0.0
    %61 = vmatprep.subr.mxu0 0.0
    %62 = vmatpush1.msra.mxu0 0.0
    %63 = vmatprep.subr.mxu0 0.0
    %64 = vmatpush1.msra.mxu0 0.0
    %65 = vmatprep.subr.mxu0 0.0
    %66 = vmatpush1.msra.mxu0 %v26
    %67 = vmatprep.subr.mxu0 0.0
    %68 = vmatpush1.msra.mxu0 %v25
    %69 = vmatprep.subr.mxu0 0.0
    %70 = vmatpush1.msra.mxu0 %v24
    %71 = vmatprep.subr.mxu0 0.0
    %72 = vmatpush1.msra.mxu0 %v23
    %73 = vmatprep.subr.mxu0 0.0
    %74 = vmatpush2.msra.mxu0 0.0
    %75 = vmatprep.subr.mxu0 0.0
    %76 = vmatpush2.msra.mxu0 0.0
    %77 = vmatprep.subr.mxu0 0.0
    %78 = vmatpush2.msra.mxu0 0.0
    %79 = vmatprep.subr.mxu0 0.0
    %80 = vmatpush2.msra.mxu0 0.0
    %81 = vmatprep.subr.mxu0 0.0
    %82 = vmatpush2.msra.mxu0 0.0
    %83 = vmatprep.subr.mxu0 0.0
    %84 = vmatpush2.msra.mxu0 0.0
    %85 = vmatprep.subr.mxu0 0.0
    %86 = vmatpush2.msra.mxu0 0.0
    %87 = vmatprep.subr.mxu0 0.0
    %88 = vmatpush2.msra.mxu0 0.0
    %89 = vmatprep.subr.mxu0 0.0
    %90 = vmatpush2.msra.mxu0 0.0
    %91 = vmatprep.subr.mxu0 0.0
    %92 = vmatpush2.msra.mxu0 0.0
    %93 = vmatprep.subr.mxu0 0.0
    %94 = vmatpush2.msra.mxu0 0.0
    %95 = vmatprep.subr.mxu0 0.0
    %96 = vmatpush2.msra.mxu0 0.0
    %97 = vmatprep.subr.mxu0 0.0
    %98 = vmatpush2.msra.mxu0 0.0
    %99 = vmatprep.subr.mxu0 0.0
    %100 = vmatpush2.msra.mxu0 0.0
    %101 = vmatprep.subr.mxu0 0.0
    %102 = vmatpush2.msra.mxu0 0.0
    %103 = vmatprep.subr.mxu0 0.0
    %104 = vmatpush2.msra.mxu0 0.0
    %105 = vmatprep.mubr.f32.mxu0 0.0
    %106 = vmatmul.mubr.f32.gmra.mxu0 %v36
    %v107 = vpop.f32.mrf.mxu0
    %v108 = vadd.f32 %v32, %v107
    %v109 = vpop.f32.mrf.mxu0
    %110 = vmatprep.mubr.f32.mxu0 0.0
    %111 = vmatmul.mubr.f32.gmra.mxu0 %v39
    %v112 = vpop.f32.mrf.mxu0
    %v113 = vadd.f32 %v32, %v112
    %v114 = vpop.f32.mrf.mxu0
    %115 = vdwg.mxu0
    %v116 = vmul.f32 %v108, %v108
    %v117 = vmul.f32 %v113, %v113
    %v118 = vmul.f32 %v108, %v116
    %v119 = vmul.f32 %v113, %v117
    %v120 = vmul.f32 %v118, 0.044715
    %v121 = vmul.f32 %v119, 0.044715
    %v122 = vadd.f32 %v108, %v120
    %v123 = vadd.f32 %v113, %v121
    %v124 = vmul.f32 %v122, 0.7978846
    %v125 = vmul.f32 %v123, 0.7978846
    %v126 = vtanh.pop %v124
    %v127 = vtanh.pop %v125
    %v128 = vadd.f32 %v126, 1.0
    %v129 = vadd.f32 %v127, 1.0
    %v130 = vmul.f32 %v128, 0.5
    %v131 = vmul.f32 %v129, 0.5
    %v132 = vmul.f32 %v108, %v130
    %v133 = vmul.f32 %v113, %v131
    %v134 = vld [vmem:[%s3] sm:$0xff]
    %v135 = vld [vmem:[%s3 + $0x8] sm:$0xff]
    %v136 = vld [vmem:[%s3 + $0x10] sm:$0xff]
    %v137 = vld [vmem:[%s3 + $0x18] sm:$0xff]
    %v138 = vld [vmem:[%s3 + $0x20] sm:$0xff]
    %v139 = vld [vmem:[%s3 + $0x28] sm:$0xff]
    %v140 = vld [vmem:[%s3 + $0x30] sm:$0xff]
    %v141 = vld [vmem:[%s3 + $0x38] sm:$0xff]
    %v142 = vld [vmem:[%s3 + $0x40] sm:$0xff]
    %v143 = vld [vmem:[%s3 + $0x48] sm:$0xff]
    %v144 = vld [vmem:[%s3 + $0x50] sm:$0xff]
    %v145 = vld [vmem:[%s3 + $0x58] sm:$0xff]
    %v146 = vld [vmem:[%s3 + $0x60] sm:$0xff]
    %v147 = vld [vmem:[%s3 + $0x68] sm:$0xff]
    %v148 = vld [vmem:[%s3 + $0x70] sm:$0xff]
    %v149 = vld [vmem:[%s3 + $0x78] sm:$0xff]
    %v150 = vld [vmem:[%s4] sm:$0x1]
    %v152 = vlaneseq
    %v153 = vshrl.u32 %v152, 7
    %v154 = vsub.s32 0, %v153
    %v155 = vrot.slane %v150, %v154
    %157 = vmatprep.subr.mxu0 0.0
    %158 = vmatpush1.msra.mxu0 %v149
    %159 = vmatprep.subr.mxu0 0.0
    %160 = vmatpush1.msra.mxu0 %v148
    %161 = vmatprep.subr.mxu0 0.0
    %162 = vmatpush1.msra.mxu0 %v147
    %163 = vmatprep.subr.mxu0 0.0
    %164 = vmatpush1.msra.mxu0 %v146
    %165 = vmatprep.subr.mxu0 0.0
    %166 = vmatpush1.msra.mxu0 %v145
    %167 = vmatprep.subr.mxu0 0.0
    %168 = vmatpush1.msra.mxu0 %v144
    %169 = vmatprep.subr.mxu0 0.0
    %170 = vmatpush1.msra.mxu0 %v143
    %171 = vmatprep.subr.mxu0 0.0
    %172 = vmatpush1.msra.mxu0 %v142
    %173 = vmatprep.subr.mxu0 0.0
    %174 = vmatpush1.msra.mxu0 %v141
    %175 = vmatprep.subr.mxu0 0.0
    %176 = vmatpush1.msra.mxu0 %v140
    %177 = vmatprep.subr.mxu0 0.0
    %178 = vmatpush1.msra.mxu0 %v139
    %179 = vmatprep.subr.mxu0 0.0
    %180 = vmatpush1.msra.mxu0 %v138
    %181 = vmatprep.subr.mxu0 0.0
    %182 = vmatpush1.msra.mxu0 %v137
    %183 = vmatprep.subr.mxu0 0.0
    %184 = vmatpush1.msra.mxu0 %v136
    %185 = vmatprep.subr.mxu0 0.0
    %186 = vmatpush1.msra.mxu0 %v135
    %187 = vmatprep.subr.mxu0 0.0
    %188 = vmatpush1.msra.mxu0 %v134
    %189 = vmatprep.subr.mxu0 0.0
    %190 = vmatpush2.msra.mxu0 0.0
    %191 = vmatprep.subr.mxu0 0.0
    %192 = vmatpush2.msra.mxu0 0.0
    %193 = vmatprep.subr.mxu0 0.0
    %194 = vmatpush2.msra.mxu0 0.0
    %195 = vmatprep.subr.mxu0 0.0
    %196 = vmatpush2.msra.mxu0 0.0
    %197 = vmatprep.subr.mxu0 0.0
    %198 = vmatpush2.msra.mxu0 0.0
    %199 = vmatprep.subr.mxu0 0.0
    %200 = vmatpush2.msra.mxu0 0.0
    %201 = vmatprep.subr.mxu0 0.0
    %202 = vmatpush2.msra.mxu0 0.0
    %203 = vmatprep.subr.mxu0 0.0
    %204 = vmatpush2.msra.mxu0 0.0
    %205 = vmatprep.subr.mxu0 0.0
    %206 = vmatpush2.msra.mxu0 0.0
    %207 = vmatprep.subr.mxu0 0.0
    %208 = vmatpush2.msra.mxu0 0.0
    %209 = vmatprep.subr.mxu0 0.0
    %210 = vmatpush2.msra.mxu0 0.0
    %211 = vmatprep.subr.mxu0 0.0
    %212 = vmatpush2.msra.mxu0 0.0
    %213 = vmatprep.subr.mxu0 0.0
    %214 = vmatpush2.msra.mxu0 0.0
    %215 = vmatprep.subr.mxu0 0.0
    %216 = vmatpush2.msra.mxu0 0.0
    %217 = vmatprep.subr.mxu0 0.0
    %218 = vmatpush2.msra.mxu0 0.0
    %219 = vmatprep.subr.mxu0 0.0
    %220 = vmatpush2.msra.mxu0 0.0
    %221 = vmatprep.mubr.f32.mxu0 0.0
    %222 = vmatmul.mubr.f32.gmra.mxu0 %v132
    %v223 = vpop.f32.mrf.mxu0
    %v224 = vadd.f32 %v155, %v223
    %v225 = vpop.f32.mrf.mxu0
    %226 = vmatprep.mubr.f32.mxu0 0.0
    %227 = vmatmul.mubr.f32.gmra.mxu0 %v133
    %v228 = vpop.f32.mrf.mxu0
    %v229 = vadd.f32 %v155, %v228
    %v230 = vpop.f32.mrf.mxu0
    %231 = vdwg.mxu0
    %232 = vst.msk [vmem:[#allocation2] sm:$0xff] %vm34, %v224
    %233 = vst.msk [vmem:[#allocation2 + $0x8] sm:$0xff] %vm34, %v229
    // Predicated region
    $region22: #{tpu_custom_call.1} parent=1 // pred_check
      _
    $region23: #{tpu_custom_call.1} parent=1 // pred_check_branch
      %235 = sbr.rel (0) target = $region25
    $region24: #{tpu_custom_call.1} parent=1 // pred_region
      %s237 = ssub.s32 256, 256
      %238 = vsyncadd [#allocation3], %s237
      %s239 = sshll.u32 [#allocation2], 4
      %s240 = int_to_ptr.vmem [resolvable:$true] %s239
      %245 = dma.vmem_to_hbm [thread:$0]  %s240, 256, %s5, [#allocation3], 128, 128, 8
    $region25: #{tpu_custom_call.1} parent=1 // pred_fallthru
      _
    // Predicated region
    $region26: #{tpu_custom_call.1} parent=1 // pred_check
      _
    $region27: #{tpu_custom_call.1} parent=1 // pred_check_branch
      %247 = sbr.rel (0) target = $region29
    $region28: #{tpu_custom_call.1} parent=1 // pred_region
      %248 = dma.done [#allocation3], 256
    $region29: #{tpu_custom_call.1} parent=1 // pred_fallthru
      _
    %249 = vsyncpa [#allocation3], 1

</llo_original>
